<compile_context>
chip_gen: v6e
topology: v6e:2x2x1
jax: 0.10.0
libtpu: 0.0.40
codegen_flags: <defaults>
</compile_context>

<pallas_src>
import math

import jax
import jax.numpy as jnp
from jax import lax
from jax.experimental import pallas as pl
from jax.experimental.pallas import tpu as pltpu

LOG_2PI = math.log(2.0 * math.pi)
MIN_LOG_STD, MAX_LOG_STD = -20.0, 2.0


def _round_up(n, m):
    return -(-n // m) * m


def _pack_offsets(data_dim, hidden_dim, flow_dim):
    """Sublane offsets of w1 / w2 / v1 / v2 inside the packed weight slab.

    Offsets are multiples of 16 so every static slice starts on a packed-sublane
    boundary even when the slab is stored in bf16."""
    o_w1 = 0
    o_w2 = o_w1 + _round_up(hidden_dim, 16)
    o_v1 = o_w2 + _round_up(2 * flow_dim, 16)
    o_v2 = o_v1 + _round_up(hidden_dim, 16)
    total = o_v2 + _round_up(data_dim, 16)
    return (o_w1, o_w2, o_v1, o_v2), total


def _make_kernel(D, H, F, offs):
    o_w1, o_w2, o_v1, o_v2 = offs
    H_pad = _round_up(H, 16)
    F2_pad = _round_up(2 * F, 16)
    D_pad = _round_up(D, 16)

    def kernel(x_ref, eps_ref, w_ref, b_ref, out_ref, iw_ref):
        f32 = jnp.float32
        mm_dt = w_ref.dtype          # MXU operand dtype (bf16 or f32); accumulation is f32

        # ---------- encoder: Linear(D->H), tanh, Linear(H->2F); activations kept (feat, rows)
        x = x_ref[...].astype(mm_dt)                                     # (tm, D), natural layout
        w1 = w_ref[o_w1:o_w1 + H_pad, :D]                                # (H_pad, D)
        b1 = b_ref[o_w1:o_w1 + H_pad, :]                                 # (H_pad, 1) f32
        # contract the two D axes directly ('hd,md->hm'): no transpose of x needed
        h = jnp.tanh(lax.dot_general(w1, x, (((1,), (1,)), ((), ())),
                                     preferred_element_type=f32) + b1)[:H, :]        # (H, tm)

        w2 = w_ref[o_w2:o_w2 + F2_pad, :H]                               # fused mu/log_std head
        b2 = b_ref[o_w2:o_w2 + F2_pad, :]
        head = (jnp.dot(w2, h.astype(mm_dt), preferred_element_type=f32) + b2)[:2 * F, :]
        mu = head[:F, :]                                                 # torch.chunk(.., 2, -1)[0]
        log_std = jnp.clip(head[F:, :], MIN_LOG_STD, MAX_LOG_STD)
        std = jnp.exp(log_std)

        # ---------- reparameterized sample  y = mu + std * eps,  eps ~ N(0, 1)
        # eps arrives natural (tm, F); transpose it to (F, tm) via a tiny identity matmul on
        # the MXU ('fk,mk->fm', same contraction pattern as above) -- keeps the wrapper free
        # of HBM transpose passes and avoids relying on small-minor-dim XLU transposes.
        eps_nat = eps_ref[...].astype(f32)                               # (tm, F)
        r = lax.broadcasted_iota(jnp.int32, (F, F), 0)
        c = lax.broadcasted_iota(jnp.int32, (F, F), 1)
        eye_f = (r == c).astype(f32)
        eps = lax.dot_general(eye_f, eps_nat, (((1,), (1,)), ((), ())),
                              preferred_element_type=f32)                # (F, tm)
        y = mu + std * eps

        # TODO(synk): flow_model is an externally injected module (self.flow(y, t, w, latent));
        # it is not defined by this module, so it is treated as identity here (z = y).
        z = y

        # ---------- decoder: Linear(F->H), tanh, Linear(H->D)
        v1 = w_ref[o_v1:o_v1 + H_pad, :F]
        c1 = b_ref[o_v1:o_v1 + H_pad, :]
        h2 = jnp.tanh(jnp.dot(v1, z.astype(mm_dt), preferred_element_type=f32) + c1)[:H, :]
        v2 = w_ref[o_v2:o_v2 + D_pad, :H]
        c2 = b_ref[o_v2:o_v2 + D_pad, :]
        out = (jnp.dot(v2, h2.astype(mm_dt), preferred_element_type=f32) + c2)[:D, :]  # (D, tm)
        out_ref[...] = out.astype(out_ref.dtype)                         # lane-dense store

        # ---------- importance weight log_q - log_p:  (y - mu)/std == eps exactly and the
        # 0.5*log(2*pi) terms cancel ->  iw = sum_f( 0.5*(y^2 - eps^2) - log_std )
        iw = jnp.sum(0.5 * (y * y - eps * eps) - log_std, axis=0, keepdims=True)       # (1, tm)
        iw_ref[...] = iw.astype(iw_ref.dtype)                            # lane-dense store

    return kernel


def _pack_params(params, matmul_dtype):
    """Pack the 8 weight/bias tensors into 2 slabs (one matmul-dtype, one f32 bias slab)."""
    w1, b1 = params["w1"], params["b1"]
    w2, b2 = params["w2"], params["b2"]
    v1, c1 = params["v1"], params["c1"]
    v2, c2 = params["v2"], params["c2"]
    H, D = w1.shape
    F = w2.shape[0] // 2
    offs, total = _pack_offsets(D, H, F)
    width = max(D, H, F)
    w_slab = jnp.zeros((total, width), jnp.float32)
    b_slab = jnp.zeros((total, 1), jnp.float32)
    for off, W, b in zip(offs, (w1, w2, v1, v2), (b1, b2, c1, c2)):
        rows, cols = W.shape
        w_slab = w_slab.at[off:off + rows, :cols].set(W)
        b_slab = b_slab.at[off:off + rows, :].set(b)
    if matmul_dtype is not None:
        w_slab = w_slab.astype(matmul_dtype)     # MXU operands only; biases stay f32
    return w_slab, b_slab, offs, (D, H, F)


def projection_forward(x, t, w, params, eps, *, tm=4096, matmul_dtype=jnp.bfloat16):
    """x: (B,S,data_dim); t: (B,S,1); w: (B,S,flow_dim); eps: (B,S,flow_dim) ~ N(0,1)."""
    del t, w  # only consumed by the injected flow model (identity here)
    B, S, D = x.shape
    F = eps.shape[-1]
    M = B * S

    w_slab, b_slab, offs, (D_, H, F_) = _pack_params(params, matmul_dtype)
    assert D_ == D and F_ == F

    # Natural row-major views -- no wrapper-side transpose / pad HBM passes.
    x2 = x.reshape(M, D)
    eps2 = eps.reshape(M, F)

    # Row tile: multiple of 128 (lane-dense transposed outputs).  For M > 256 force at
    # least 2 grid steps so "parallel" can shard rows across v7x's two TensorCores; any
    # trailing partial block is handled by Pallas block masking.
    tm = max(128, (tm // 128) * 128)
    if M <= 256:
        tm_eff, grid_m = M, 1                       # one exact block, no masking needed
    else:
        half = _round_up(-(-M // 2), 128)           # ceil(M/2) rounded up to a lane multiple
        tm_eff = min(tm, half)
        grid_m = pl.cdiv(M, tm_eff)

    kernel = _make_kernel(D, H, F, offs)

    cost = pl.CostEstimate(
        flops=2 * M * (D * H + H * 2 * F + F * F + F * H + H * D),
        transcendentals=M * (2 * H + F),
        bytes_accessed=(4 * M * (D + F + D + 1)
                        + w_slab.size * w_slab.dtype.itemsize
                        + b_slab.size * 4),
    )

    out_t, iw_t = pl.pallas_call(
        kernel,
        out_shape=(jax.ShapeDtypeStruct((D, M), x.dtype),
                   jax.ShapeDtypeStruct((1, M), jnp.float32)),
        grid=(grid_m,),
        in_specs=[
            pl.BlockSpec((tm_eff, D), lambda i: (i, 0)),
            pl.BlockSpec((tm_eff, F), lambda i: (i, 0)),
            pl.BlockSpec(w_slab.shape, lambda i: (0, 0)),   # constant block -> fetched once
            pl.BlockSpec(b_slab.shape, lambda i: (0, 0)),
        ],
        out_specs=(pl.BlockSpec((D, tm_eff), lambda i: (0, i)),
                   pl.BlockSpec((1, tm_eff), lambda i: (0, i))),
        compiler_params=pltpu.CompilerParams(
            dimension_semantics=("parallel",)),     # rows shard across v7x's 2 TensorCores
        cost_estimate=cost,
    )(x2, eps2, w_slab, b_slab)

    # TODO(synk): if the downstream consumer can take (feature, rows) directly, return
    # out_t / iw_t as-is and skip this wrapper-side transpose pass.
    out = out_t.T.reshape(B, S, D)
    iw = iw_t.reshape(B, S, 1)
    return out, iw


def init_params(key, data_dim, hidden_dim, flow_dim):
    """Deterministic nn.Linear-style init (U(-1/sqrt(fan_in), 1/sqrt(fan_in))).

    Weights are stored in torch layout (out_features, in_features) and biases as
    (out_features, 1) so the kernel's transposed (feature, rows) math uses them directly.
    The mu/log_std head stays fused as one (2*flow_dim, H) matrix; torch.chunk(.., 2, -1)
    corresponds to splitting its output rows in half."""
    ks = jax.random.split(key, 4)

    def linear(k, fan_in, fan_out):
        bound = 1.0 / math.sqrt(fan_in)
        kw, kb = jax.random.split(k)
        W = jax.random.uniform(kw, (fan_out, fan_in), jnp.float32, -bound, bound)
        b = jax.random.uniform(kb, (fan_out, 1), jnp.float32, -bound, bound)
        return W, b

    w1, b1 = linear(ks[0], data_dim, hidden_dim)        # encoder layer 1
    w2, b2 = linear(ks[1], hidden_dim, 2 * flow_dim)    # fused mu/log_std head
    v1, c1 = linear(ks[2], flow_dim, hidden_dim)        # decoder layer 1
    v2, c2 = linear(ks[3], hidden_dim, data_dim)        # decoder layer 2
    return dict(w1=w1, b1=b1, w2=w2, b2=b2, v1=v1, c1=c1, v2=v2, c2=c2)


def reference_forward(x, params, eps):
    """Pure-JAX reference matching the PyTorch module semantics (flow = identity)."""
    B, S, D = x.shape
    F = eps.shape[-1]
    x2 = x.reshape(-1, D)
    eps2 = eps.reshape(-1, F)
    h = jnp.tanh(x2 @ params["w1"].T + params["b1"].T)
    head = h @ params["w2"].T + params["b2"].T
    mu, log_std = head[:, :F], jnp.clip(head[:, F:], MIN_LOG_STD, MAX_LOG_STD)
    std = jnp.exp(log_std)
    y = mu + std * eps2
    z = y
    h2 = jnp.tanh(z @ params["v1"].T + params["c1"].T)
    out = h2 @ params["v2"].T + params["c2"].T
    log_q = jnp.sum(-0.5 * jnp.square((y - mu) / std) - log_std - 0.5 * LOG_2PI,
                    axis=-1, keepdims=True)
    log_p = jnp.sum(-0.5 * jnp.square(y) - 0.5 * LOG_2PI, axis=-1, keepdims=True)
    return out.reshape(B, S, D), (log_q - log_p).reshape(B, S, 1)


if __name__ == "__main__":
    key = jax.random.PRNGKey(0)
    kp, kx, ke, kw = jax.random.split(key, 4)

    B, S = 2, 8           # batch, sequence length
    data_dim = 4
    hidden_dim = 32
    flow_dim = 8

    params = init_params(kp, data_dim, hidden_dim, flow_dim)

    x = jax.random.normal(kx, (B, S, data_dim), jnp.float32)
    t = jnp.broadcast_to(jnp.linspace(0.0, 1.0, S).reshape(1, S, 1), (B, S, 1))
    w = jax.random.normal(kw, (B, S, flow_dim), jnp.float32)
    # reparameterization noise for Normal(mu, std).rsample()
    eps = jax.random.normal(ke, (B, S, flow_dim), jnp.float32)

    out_ref, iw_ref = reference_forward(x, params, eps)

    # Full-f32 MXU path: tight check against the pure-JAX reference.
    out32, iw32 = projection_forward(x, t, w, params, eps, matmul_dtype=None)
    jax.block_until_ready((out32, iw32))
    assert out32.shape == (B, S, data_dim) and iw32.shape == (B, S, 1)
    assert jnp.allclose(out32, out_ref, rtol=1e-3, atol=1e-3)
    assert jnp.allclose(iw32, iw_ref, rtol=1e-3, atol=1e-3)

    # Default bf16-MXU path (f32 accumulation + f32 element-wise math): loose check.
    out, iw = projection_forward(x, t, w, params, eps)
    jax.block_until_ready((out, iw))
    assert out.shape == (B, S, data_dim) and iw.shape == (B, S, 1)
    assert jnp.all(jnp.isfinite(out)) and jnp.all(jnp.isfinite(iw))
    assert jnp.allclose(out, out_ref, rtol=1e-1, atol=1e-1)
    assert jnp.allclose(iw, iw_ref, rtol=1e-1, atol=1e-1)

    print("KERNEL_OK")
</pallas_src>

<mosaic_0001>
module attributes {stable_mosaic.version = 11 : i64} {
  func.func @kernel(%arg0: i32, %arg1: memref<16x4xf32, #tpu.memory_space<vmem>>, %arg2: memref<16x8xf32, #tpu.memory_space<vmem>>, %arg3: memref<96x32xf32, #tpu.memory_space<vmem>>, %arg4: memref<96x1xf32, #tpu.memory_space<vmem>>, %arg5: memref<4x16xf32, #tpu.memory_space<vmem>>, %arg6: memref<1x16xf32, #tpu.memory_space<vmem>>) attributes {dimension_semantics = [#tpu.dimension_semantics<parallel>], iteration_bounds = array<i64: 1>, scalar_prefetch = 0 : i64, scratch_operands = 0 : i64, tpu.core_type = #tpu.core_type<tc>, window_params = [{transform_indices = @transform_0, window_bounds = array<i64: 16, 4>}, {transform_indices = @transform_1, window_bounds = array<i64: 16, 8>}, {pipeline_mode = #tpu.pipeline_mode<synchronous>, transform_indices = @transform_2, window_bounds = array<i64: 96, 32>}, {pipeline_mode = #tpu.pipeline_mode<synchronous>, transform_indices = @transform_3, window_bounds = array<i64: 96, 1>}, {transform_indices = @transform_4, window_bounds = array<i64: 4, 16>}, {transform_indices = @transform_5, window_bounds = array<i64: 1, 16>}]} {
    %c0 = arith.constant 0 : index
    %c0_0 = arith.constant 0 : index
    %0 = vector.load %arg1[%c0, %c0_0] : memref<16x4xf32, #tpu.memory_space<vmem>>, vector<16x4xf32>
    %c0_1 = arith.constant 0 : index
    %c0_2 = arith.constant 0 : index
    %1 = vector.load %arg3[%c0_1, %c0_2] : memref<96x32xf32, #tpu.memory_space<vmem>>, vector<32x4xf32>
    %c0_3 = arith.constant 0 : index
    %c0_4 = arith.constant 0 : index
    %2 = vector.load %arg4[%c0_3, %c0_4] : memref<96x1xf32, #tpu.memory_space<vmem>>, vector<32x1xf32>
    %cst = arith.constant dense<0.000000e+00> : vector<32x16xf32>
    %3 = tpu.matmul %1, %0, %cst {dimension_numbers = #tpu.dot_dimension_numbers<[1], [1], [0], [0], [0, 0, 1, 0], [], []>} : vector<32x4xf32>, vector<16x4xf32>, vector<32x16xf32> -> vector<32x16xf32>
    %4 = vector.broadcast %2 : vector<32x1xf32> to vector<32x16xf32>
    %5 = arith.addf %3, %4 : vector<32x16xf32>
    %6 = math.tanh %5 : vector<32x16xf32>
    %c32 = arith.constant 32 : index
    %c0_5 = arith.constant 0 : index
    %7 = vector.load %arg3[%c32, %c0_5] : memref<96x32xf32, #tpu.memory_space<vmem>>, vector<16x32xf32>
    %c32_6 = arith.constant 32 : index
    %c0_7 = arith.constant 0 : index
    %8 = vector.load %arg4[%c32_6, %c0_7] : memref<96x1xf32, #tpu.memory_space<vmem>>, vector<16x1xf32>
    %cst_8 = arith.constant dense<0.000000e+00> : vector<16x16xf32>
    %9 = tpu.matmul %7, %6, %cst_8 {dimension_numbers = #tpu.dot_dimension_numbers<[1], [0], [0], [1], [0, 0, 1, 1], [], []>} : vector<16x32xf32>, vector<32x16xf32>, vector<16x16xf32> -> vector<16x16xf32>
    %10 = vector.broadcast %8 : vector<16x1xf32> to vector<16x16xf32>
    %11 = arith.addf %9, %10 : vector<16x16xf32>
    %12 = vector.extract_strided_slice %11 {offsets = [0, 0], sizes = [8, 16], strides = [1, 1]} : vector<16x16xf32> to vector<8x16xf32>
    %13 = vector.extract_strided_slice %11 {offsets = [8, 0], sizes = [8, 16], strides = [1, 1]} : vector<16x16xf32> to vector<8x16xf32>
    %cst_9 = arith.constant -2.000000e+01 : f32
    %cst_10 = arith.constant 2.000000e+00 : f32
    %14 = vector.broadcast %cst_9 : f32 to vector<8x16xf32>
    %15 = arith.maximumf %14, %13 : vector<8x16xf32>
    %16 = vector.broadcast %cst_10 : f32 to vector<8x16xf32>
    %17 = arith.minimumf %16, %15 : vector<8x16xf32>
    %18 = math.exp %17 : vector<8x16xf32>
    %c0_11 = arith.constant 0 : index
    %c0_12 = arith.constant 0 : index
    %19 = vector.load %arg2[%c0_11, %c0_12] : memref<16x8xf32, #tpu.memory_space<vmem>>, vector<16x8xf32>
    %20 = tpu.iota {dimensions = array<i32: 0>} : vector<8x8xi32>
    %21 = tpu.iota {dimensions = array<i32: 1>} : vector<8x8xi32>
    %22 = arith.cmpi eq, %20, %21 : vector<8x8xi32>
    %23 = arith.extui %22 : vector<8x8xi1> to vector<8x8xi32>
    %24 = arith.sitofp %23 : vector<8x8xi32> to vector<8x8xf32>
    %cst_13 = arith.constant dense<0.000000e+00> : vector<8x16xf32>
    %25 = tpu.matmul %24, %19, %cst_13 {dimension_numbers = #tpu.dot_dimension_numbers<[1], [1], [0], [0], [0, 0, 1, 0], [], []>} : vector<8x8xf32>, vector<16x8xf32>, vector<8x16xf32> -> vector<8x16xf32>
    %26 = arith.mulf %18, %25 : vector<8x16xf32>
    %27 = arith.addf %12, %26 : vector<8x16xf32>
    %c48 = arith.constant 48 : index
    %c0_14 = arith.constant 0 : index
    %28 = vector.load %arg3[%c48, %c0_14] : memref<96x32xf32, #tpu.memory_space<vmem>>, vector<32x8xf32>
    %c48_15 = arith.constant 48 : index
    %c0_16 = arith.constant 0 : index
    %29 = vector.load %arg4[%c48_15, %c0_16] : memref<96x1xf32, #tpu.memory_space<vmem>>, vector<32x1xf32>
    %cst_17 = arith.constant dense<0.000000e+00> : vector<32x16xf32>
    %30 = tpu.matmul %28, %27, %cst_17 {dimension_numbers = #tpu.dot_dimension_numbers<[1], [0], [0], [1], [0, 0, 1, 1], [], []>} : vector<32x8xf32>, vector<8x16xf32>, vector<32x16xf32> -> vector<32x16xf32>
    %31 = vector.broadcast %29 : vector<32x1xf32> to vector<32x16xf32>
    %32 = arith.addf %30, %31 : vector<32x16xf32>
    %33 = math.tanh %32 : vector<32x16xf32>
    %c80 = arith.constant 80 : index
    %c0_18 = arith.constant 0 : index
    %34 = vector.load %arg3[%c80, %c0_18] : memref<96x32xf32, #tpu.memory_space<vmem>>, vector<16x32xf32>
    %c80_19 = arith.constant 80 : index
    %c0_20 = arith.constant 0 : index
    %35 = vector.load %arg4[%c80_19, %c0_20] : memref<96x1xf32, #tpu.memory_space<vmem>>, vector<16x1xf32>
    %cst_21 = arith.constant dense<0.000000e+00> : vector<16x16xf32>
    %36 = tpu.matmul %34, %33, %cst_21 {dimension_numbers = #tpu.dot_dimension_numbers<[1], [0], [0], [1], [0, 0, 1, 1], [], []>} : vector<16x32xf32>, vector<32x16xf32>, vector<16x16xf32> -> vector<16x16xf32>
    %37 = vector.broadcast %35 : vector<16x1xf32> to vector<16x16xf32>
    %38 = arith.addf %36, %37 : vector<16x16xf32>
    %39 = vector.extract_strided_slice %38 {offsets = [0, 0], sizes = [4, 16], strides = [1, 1]} : vector<16x16xf32> to vector<4x16xf32>
    %c0_22 = arith.constant 0 : index
    %c0_23 = arith.constant 0 : index
    %40 = vector.load %arg5[%c0_22, %c0_23] : memref<4x16xf32, #tpu.memory_space<vmem>>, vector<4x16xf32>
    tpu.vector_store %arg5[%c0_22, %c0_23], %39 {strides = array<i32>} : memref<4x16xf32, #tpu.memory_space<vmem>>, vector<4x16xf32>,
    %41 = arith.mulf %27, %27 : vector<8x16xf32>
    %42 = arith.mulf %25, %25 : vector<8x16xf32>
    %43 = arith.subf %41, %42 : vector<8x16xf32>
    %cst_24 = arith.constant 5.000000e-01 : f32
    %44 = vector.broadcast %cst_24 : f32 to vector<8x16xf32>
    %45 = arith.mulf %44, %43 : vector<8x16xf32>
    %46 = arith.subf %45, %17 : vector<8x16xf32>
    %cst_25 = arith.constant dense<0.000000e+00> : vector<16xf32>
    %47 = vector.multi_reduction <add>, %46, %cst_25 [0] : vector<8x16xf32> to vector<16xf32>
    %48 = vector.shape_cast %47 : vector<16xf32> to vector<1x16xf32>
    %c0_26 = arith.constant 0 : index
    %c0_27 = arith.constant 0 : index
    %49 = vector.load %arg6[%c0_26, %c0_27] : memref<1x16xf32, #tpu.memory_space<vmem>>, vector<1x16xf32>
    tpu.vector_store %arg6[%c0_26, %c0_27], %48 {strides = array<i32>} : memref<1x16xf32, #tpu.memory_space<vmem>>, vector<1x16xf32>,
    return
  }
  func.func @transform_0(%arg0: i32) -> (i32, i32) {
    %c0_i32 = arith.constant 0 : i32
    %c0_i32_0 = arith.constant 0 : i32
    return %arg0, %c0_i32 : i32, i32
  }
  func.func @transform_1(%arg0: i32) -> (i32, i32) {
    %c0_i32 = arith.constant 0 : i32
    %c0_i32_0 = arith.constant 0 : i32
    return %arg0, %c0_i32 : i32, i32
  }
  func.func @transform_2(%arg0: i32) -> (i32, i32) {
    %c0_i32 = arith.constant 0 : i32
    %c0_i32_0 = arith.constant 0 : i32
    %c0_i32_1 = arith.constant 0 : i32
    return %c0_i32, %c0_i32_0 : i32, i32
  }
  func.func @transform_3(%arg0: i32) -> (i32, i32) {
    %c0_i32 = arith.constant 0 : i32
    %c0_i32_0 = arith.constant 0 : i32
    %c0_i32_1 = arith.constant 0 : i32
    return %c0_i32, %c0_i32_0 : i32, i32
  }
  func.func @transform_4(%arg0: i32) -> (i32, i32) {
    %c0_i32 = arith.constant 0 : i32
    %c0_i32_0 = arith.constant 0 : i32
    return %c0_i32, %arg0 : i32, i32
  }
  func.func @transform_5(%arg0: i32) -> (i32, i32) {
    %c0_i32 = arith.constant 0 : i32
    %c0_i32_0 = arith.constant 0 : i32
    return %c0_i32, %arg0 : i32, i32
  }
}

</mosaic_0001>

<llo_original>
// kernel: tpu_custom_call.1
$region0: #{tpu_custom_call.1}
  #allocation0 [shape = 'u32[]', space=smem, size = 0x4, offset = 0x4, fixed_abs, tag = 'smem constant byte address 0x4 - core index']
  #allocation1 [shape = 'u32[144,128]{1,0:T(1,128)}', space=vmem, size = 0x12000, scoped, tag = 'internal scratch']
  %s0 = inlined_call_operand.vmem [shape: f32[16,4], index: 0, kind: input, shape index: {}]
  %s1 = inlined_call_operand.vmem [shape: f32[16,8], index: 1, kind: input, shape index: {}]
  %s2 = inlined_call_operand.vmem [shape: f32[96,32], index: 2, kind: input, shape index: {}]
  %s3 = inlined_call_operand.vmem [shape: f32[96,1], index: 3, kind: input, shape index: {}]
  %s4 = inlined_call_operand.hbm [shape: f32[4,16], index: 4, kind: output, shape index: {0}]
  %s5 = inlined_call_operand.hbm [shape: f32[1,16], index: 5, kind: output, shape index: {1}]
  %6 = xla_tuple %s4, %s5
  %s7 = sld [smem:[#allocation0]]
  $region34: #{tpu_custom_call.1} parent=0
    _
  %s9 = ssub.s32 1, %s7
  %s10 = scalar_select 0, %s9, %s7
  $region1: #{tpu_custom_call.1} parent=0
    #allocation2 [shape = 'u8[2048]{0}', space=vmem, size = 0x800, scoped, tag = 'output window, operand 0, single buffered']
    #allocation3 [shape = 's32[1]{0}', space=sflag, size = 0x4, scoped, tag = 'scoped memory for tpu_custom_call.1']
    #allocation4 [shape = 'u8[512]{0}', space=vmem, size = 0x400, scoped, tag = 'output window, operand 1, single buffered']
    #allocation5 [shape = 's32[1]{0}', space=sflag, size = 0x4, scoped, tag = 'scoped memory for tpu_custom_call.1']
    %11 = vsyncpa [#allocation3], 0
    %12 = vsyncpa [#allocation5], 0
    // Predicated region
    $region2: #{tpu_custom_call.1} parent=1 // pred_check
      _
    $region3: #{tpu_custom_call.1} parent=1 // pred_check_branch
      %14 = sbr.rel (0) target = $region5
    $region4: #{tpu_custom_call.1} parent=1 // pred_region
      _
    $region5: #{tpu_custom_call.1} parent=1 // pred_fallthru
      _
    // Predicated region
    $region6: #{tpu_custom_call.1} parent=1 // pred_check
      _
    $region7: #{tpu_custom_call.1} parent=1 // pred_check_branch
      %16 = sbr.rel (0) target = $region9
    $region8: #{tpu_custom_call.1} parent=1 // pred_region
      _
    $region9: #{tpu_custom_call.1} parent=1 // pred_fallthru
      _
    // Predicated region
    $region10: #{tpu_custom_call.1} parent=1 // pred_check
      _
    $region11: #{tpu_custom_call.1} parent=1 // pred_check_branch
      %18 = sbr.rel (0) target = $region13
    $region12: #{tpu_custom_call.1} parent=1 // pred_region
      _
    $region13: #{tpu_custom_call.1} parent=1 // pred_fallthru
      _
    // Predicated region
    $region14: #{tpu_custom_call.1} parent=1 // pred_check
      _
    $region15: #{tpu_custom_call.1} parent=1 // pred_check_branch
      %20 = sbr.rel (0) target = $region17
    $region16: #{tpu_custom_call.1} parent=1 // pred_region
      _
    $region17: #{tpu_custom_call.1} parent=1 // pred_fallthru
      _
    %v21 = vld [vmem:[%s0] sm:$0xff]
    %v22 = vld [vmem:[%s0 + $0x8] sm:$0xff]
    %v23 = vld [vmem:[%s2] sm:$0xff]
    %v24 = vld [vmem:[%s2 + $0x8] sm:$0xff]
    %v25 = vld [vmem:[%s2 + $0x10] sm:$0xff]
    %v26 = vld [vmem:[%s2 + $0x18] sm:$0xff]
    %v27 = vld [vmem:[%s3] sm:$0xff]
    %v28 = vld [vmem:[%s3 + $0x8] sm:$0xff]
    %v29 = vld [vmem:[%s3 + $0x10] sm:$0xff]
    %v30 = vld [vmem:[%s3 + $0x18] sm:$0xff]
    %32 = vset.pattern.permute.xlu0 0
    %33 = vperm.xlu0 %32, %v27
    %v34 = vpop.permute.xlu0 %33
    %37 = vset.pattern.permute.xlu0 0
    %38 = vperm.xlu0 %37, %v28
    %v39 = vpop.permute.xlu0 %38
    %42 = vset.pattern.permute.xlu0 0
    %43 = vperm.xlu0 %42, %v29
    %v44 = vpop.permute.xlu0 %43
    %47 = vset.pattern.permute.xlu0 0
    %48 = vperm.xlu0 %47, %v30
    %v49 = vpop.permute.xlu0 %48
    %vm51 = vcmask 31744
    %v53 = vsel %vm51, %v23, 0
    %v56 = vsel %vm51, %v24, 0
    %v59 = vsel %vm51, %v25, 0
    %v62 = vsel %vm51, %v26, 0
    %v65 = vsel %vm51, %v21, 0
    %v68 = vsel %vm51, %v22, 0
    %70 = vmatprep.subr.mxu0 0.0
    %71 = vmatpush1.xpose.msra.mxu0 0.0
    %72 = vmatprep.subr.mxu0 0.0
    %73 = vmatpush1.xpose.msra.mxu0 0.0
    %74 = vmatprep.subr.mxu0 0.0
    %75 = vmatpush1.xpose.msra.mxu0 0.0
    %76 = vmatprep.subr.mxu0 0.0
    %77 = vmatpush1.xpose.msra.mxu0 0.0
    %78 = vmatprep.subr.mxu0 0.0
    %79 = vmatpush1.xpose.msra.mxu0 0.0
    %80 = vmatprep.subr.mxu0 0.0
    %81 = vmatpush1.xpose.msra.mxu0 0.0
    %82 = vmatprep.subr.mxu0 0.0
    %83 = vmatpush1.xpose.msra.mxu0 0.0
    %84 = vmatprep.subr.mxu0 0.0
    %85 = vmatpush1.xpose.msra.mxu0 0.0
    %86 = vmatprep.subr.mxu0 0.0
    %87 = vmatpush1.xpose.msra.mxu0 0.0
    %88 = vmatprep.subr.mxu0 0.0
    %89 = vmatpush1.xpose.msra.mxu0 0.0
    %90 = vmatprep.subr.mxu0 0.0
    %91 = vmatpush1.xpose.msra.mxu0 0.0
    %92 = vmatprep.subr.mxu0 0.0
    %93 = vmatpush1.xpose.msra.mxu0 0.0
    %94 = vmatprep.subr.mxu0 0.0
    %95 = vmatpush1.xpose.msra.mxu0 0.0
    %96 = vmatprep.subr.mxu0 0.0
    %97 = vmatpush1.xpose.msra.mxu0 0.0
    %98 = vmatprep.subr.mxu0 0.0
    %99 = vmatpush1.xpose.msra.mxu0 %v68
    %100 = vmatprep.subr.mxu0 0.0
    %101 = vmatpush1.xpose.msra.mxu0 %v65
    %102 = vmatprep.subr.mxu0 0.0
    %103 = vmatpush2.xpose.msra.mxu0 0.0
    %104 = vmatprep.subr.mxu0 0.0
    %105 = vmatpush2.xpose.msra.mxu0 0.0
    %106 = vmatprep.subr.mxu0 0.0
    %107 = vmatpush2.xpose.msra.mxu0 0.0
    %108 = vmatprep.subr.mxu0 0.0
    %109 = vmatpush2.xpose.msra.mxu0 0.0
    %110 = vmatprep.subr.mxu0 0.0
    %111 = vmatpush2.xpose.msra.mxu0 0.0
    %112 = vmatprep.subr.mxu0 0.0
    %113 = vmatpush2.xpose.msra.mxu0 0.0
    %114 = vmatprep.subr.mxu0 0.0
    %115 = vmatpush2.xpose.msra.mxu0 0.0
    %116 = vmatprep.subr.mxu0 0.0
    %117 = vmatpush2.xpose.msra.mxu0 0.0
    %118 = vmatprep.subr.mxu0 0.0
    %119 = vmatpush2.xpose.msra.mxu0 0.0
    %120 = vmatprep.subr.mxu0 0.0
    %121 = vmatpush2.xpose.msra.mxu0 0.0
    %122 = vmatprep.subr.mxu0 0.0
    %123 = vmatpush2.xpose.msra.mxu0 0.0
    %124 = vmatprep.subr.mxu0 0.0
    %125 = vmatpush2.xpose.msra.mxu0 0.0
    %126 = vmatprep.subr.mxu0 0.0
    %127 = vmatpush2.xpose.msra.mxu0 0.0
    %128 = vmatprep.subr.mxu0 0.0
    %129 = vmatpush2.xpose.msra.mxu0 0.0
    %130 = vmatprep.subr.mxu0 0.0
    %131 = vmatpush2.xpose.msra.mxu0 0.0
    %132 = vmatprep.subr.mxu0 0.0
    %133 = vmatpush2.xpose.msra.mxu0 0.0
    %134 = vmatprep.mubr.f32.mxu0 0.0
    %135 = vmatmul.mubr.f32.gmra.mxu0 %v53
    %v136 = vpop.f32.mrf.mxu0
    %v137 = vadd.f32 %v34, %v136
    %v138 = vpop.f32.mrf.mxu0
    %139 = vmatprep.mubr.f32.mxu0 0.0
    %140 = vmatmul.mubr.f32.gmra.mxu0 %v56
    %v141 = vpop.f32.mrf.mxu0
    %v142 = vadd.f32 %v39, %v141
    %v143 = vpop.f32.mrf.mxu0
    %144 = vmatprep.mubr.f32.mxu0 0.0
    %145 = vmatmul.mubr.f32.gmra.mxu0 %v59
    %v146 = vpop.f32.mrf.mxu0
    %v147 = vadd.f32 %v44, %v146
    %v148 = vpop.f32.mrf.mxu0
    %149 = vmatprep.mubr.f32.mxu0 0.0
    %150 = vmatmul.mubr.f32.gmra.mxu0 %v62
    %v151 = vpop.f32.mrf.mxu0
    %v152 = vadd.f32 %v49, %v151
    %v153 = vpop.f32.mrf.mxu0
    %154 = vdwg.mxu0
    %v155 = vtanh.pop %v137
    %v156 = vtanh.pop %v142
    %v157 = vtanh.pop %v147
    %v158 = vtanh.pop %v152
    %v159 = vld [vmem:[%s2 + $0x20] sm:$0xff]
    %v160 = vld [vmem:[%s2 + $0x28] sm:$0xff]
    %v161 = vld [vmem:[%s3 + $0x20] sm:$0xff]
    %v162 = vld [vmem:[%s3 + $0x28] sm:$0xff]
    %164 = vset.pattern.permute.xlu0 0
    %165 = vperm.xlu0 %164, %v161
    %v166 = vpop.permute.xlu0 %165
    %169 = vset.pattern.permute.xlu0 0
    %170 = vperm.xlu0 %169, %v162
    %v171 = vpop.permute.xlu0 %170
    %vm173 = vcmask 261120
    %v175 = vsel %vm173, %v159, 0
    %v178 = vsel %vm173, %v160, 0
    %180 = vmatprep.subr.mxu0 0.0
    %181 = vmatpush1.msra.mxu0 0.0
    %182 = vmatprep.subr.mxu0 0.0
    %183 = vmatpush1.msra.mxu0 0.0
    %184 = vmatprep.subr.mxu0 0.0
    %185 = vmatpush1.msra.mxu0 0.0
    %186 = vmatprep.subr.mxu0 0.0
    %187 = vmatpush1.msra.mxu0 0.0
    %188 = vmatprep.subr.mxu0 0.0
    %189 = vmatpush1.msra.mxu0 0.0
    %190 = vmatprep.subr.mxu0 0.0
    %191 = vmatpush1.msra.mxu0 0.0
    %192 = vmatprep.subr.mxu0 0.0
    %193 = vmatpush1.msra.mxu0 0.0
    %194 = vmatprep.subr.mxu0 0.0
    %195 = vmatpush1.msra.mxu0 0.0
    %196 = vmatprep.subr.mxu0 0.0
    %197 = vmatpush1.msra.mxu0 0.0
    %198 = vmatprep.subr.mxu0 0.0
    %199 = vmatpush1.msra.mxu0 0.0
    %200 = vmatprep.subr.mxu0 0.0
    %201 = vmatpush1.msra.mxu0 0.0
    %202 = vmatprep.subr.mxu0 0.0
    %203 = vmatpush1.msra.mxu0 0.0
    %204 = vmatprep.subr.mxu0 0.0
    %205 = vmatpush1.msra.mxu0 %v158
    %206 = vmatprep.subr.mxu0 0.0
    %207 = vmatpush1.msra.mxu0 %v157
    %208 = vmatprep.subr.mxu0 0.0
    %209 = vmatpush1.msra.mxu0 %v156
    %210 = vmatprep.subr.mxu0 0.0
    %211 = vmatpush1.msra.mxu0 %v155
    %212 = vmatprep.subr.mxu0 0.0
    %213 = vmatpush2.msra.mxu0 0.0
    %214 = vmatprep.subr.mxu0 0.0
    %215 = vmatpush2.msra.mxu0 0.0
    %216 = vmatprep.subr.mxu0 0.0
    %217 = vmatpush2.msra.mxu0 0.0
    %218 = vmatprep.subr.mxu0 0.0
    %219 = vmatpush2.msra.mxu0 0.0
    %220 = vmatprep.subr.mxu0 0.0
    %221 = vmatpush2.msra.mxu0 0.0
    %222 = vmatprep.subr.mxu0 0.0
    %223 = vmatpush2.msra.mxu0 0.0
    %224 = vmatprep.subr.mxu0 0.0
    %225 = vmatpush2.msra.mxu0 0.0
    %226 = vmatprep.subr.mxu0 0.0
    %227 = vmatpush2.msra.mxu0 0.0
    %228 = vmatprep.subr.mxu0 0.0
    %229 = vmatpush2.msra.mxu0 0.0
    %230 = vmatprep.subr.mxu0 0.0
    %231 = vmatpush2.msra.mxu0 0.0
    %232 = vmatprep.subr.mxu0 0.0
    %233 = vmatpush2.msra.mxu0 0.0
    %234 = vmatprep.subr.mxu0 0.0
    %235 = vmatpush2.msra.mxu0 0.0
    %236 = vmatprep.subr.mxu0 0.0
    %237 = vmatpush2.msra.mxu0 0.0
    %238 = vmatprep.subr.mxu0 0.0
    %239 = vmatpush2.msra.mxu0 0.0
    %240 = vmatprep.subr.mxu0 0.0
    %241 = vmatpush2.msra.mxu0 0.0
    %242 = vmatprep.subr.mxu0 0.0
    %243 = vmatpush2.msra.mxu0 0.0
    %244 = vmatprep.mubr.f32.mxu0 0.0
    %245 = vmatmul.mubr.f32.gmra.mxu0 %v175
    %v246 = vpop.f32.mrf.mxu0
    %v247 = vadd.f32 %v166, %v246
    %v248 = vpop.f32.mrf.mxu0
    %249 = vmatprep.mubr.f32.mxu0 0.0
    %250 = vmatmul.mubr.f32.gmra.mxu0 %v178
    %v251 = vpop.f32.mrf.mxu0
    %v252 = vadd.f32 %v171, %v251
    %v253 = vpop.f32.mrf.mxu0
    %254 = vdwg.mxu0
    %v255 = vmax.f32 %v252, -20.0
    %v256 = vmin.f32 %v255, 2.0
    %v257 = vmul.f32 %v256, 1.442695
    %v258 = vpow.pop %v257
    %v259 = vld [vmem:[%s1] sm:$0xff]
    %v260 = vld [vmem:[%s1 + $0x8] sm:$0xff]
    %v261 = vlaneseq
    %v262 = vshrl.u32 %v261, 7
    %v263 = vlaneseq
    %v264 = vand.u32 %v263, 127
    %vm265 = vcmp.eq.s32.totalorder %v262, %v264
    %v266 = vsel %vm265, 1, 0
    %v267 = vcvt.s32.f32 %v266
    %vm268 = vcmask 64512
    %v270 = vsel %vm268, %v267, 0
    %v273 = vsel %vm268, %v259, 0
    %v276 = vsel %vm268, %v260, 0
    %278 = vmatprep.subr.mxu0 0.0
    %279 = vmatpush1.xpose.msra.mxu0 0.0
    %280 = vmatprep.subr.mxu0 0.0
    %281 = vmatpush1.xpose.msra.mxu0 0.0
    %282 = vmatprep.subr.mxu0 0.0
    %283 = vmatpush1.xpose.msra.mxu0 0.0
    %284 = vmatprep.subr.mxu0 0.0
    %285 = vmatpush1.xpose.msra.mxu0 0.0
    %286 = vmatprep.subr.mxu0 0.0
    %287 = vmatpush1.xpose.msra.mxu0 0.0
    %288 = vmatprep.subr.mxu0 0.0
    %289 = vmatpush1.xpose.msra.mxu0 0.0
    %290 = vmatprep.subr.mxu0 0.0
    %291 = vmatpush1.xpose.msra.mxu0 0.0
    %292 = vmatprep.subr.mxu0 0.0
    %293 = vmatpush1.xpose.msra.mxu0 0.0
    %294 = vmatprep.subr.mxu0 0.0
    %295 = vmatpush1.xpose.msra.mxu0 0.0
    %296 = vmatprep.subr.mxu0 0.0
    %297 = vmatpush1.xpose.msra.mxu0 0.0
    %298 = vmatprep.subr.mxu0 0.0
    %299 = vmatpush1.xpose.msra.mxu0 0.0
    %300 = vmatprep.subr.mxu0 0.0
    %301 = vmatpush1.xpose.msra.mxu0 0.0
    %302 = vmatprep.subr.mxu0 0.0
    %303 = vmatpush1.xpose.msra.mxu0 0.0
    %304 = vmatprep.subr.mxu0 0.0
    %305 = vmatpush1.xpose.msra.mxu0 0.0
    %306 = vmatprep.subr.mxu0 0.0
    %307 = vmatpush1.xpose.msra.mxu0 %v276
    %308 = vmatprep.subr.mxu0 0.0
    %309 = vmatpush1.xpose.msra.mxu0 %v273
    %310 = vmatprep.subr.mxu0 0.0
    %311 = vmatpush2.xpose.msra.mxu0 0.0
    %312 = vmatprep.subr.mxu0 0.0
    %313 = vmatpush2.xpose.msra.mxu0 0.0
    %314 = vmatprep.subr.mxu0 0.0
    %315 = vmatpush2.xpose.msra.mxu0 0.0
    %316 = vmatprep.subr.mxu0 0.0
    %317 = vmatpush2.xpose.msra.mxu0 0.0
    %318 = vmatprep.subr.mxu0 0.0
    %319 = vmatpush2.xpose.msra.mxu0 0.0
    %320 = vmatprep.subr.mxu0 0.0
    %321 = vmatpush2.xpose.msra.mxu0 0.0
    %322 = vmatprep.subr.mxu0 0.0
    %323 = vmatpush2.xpose.msra.mxu0 0.0
    %324 = vmatprep.subr.mxu0 0.0
    %325 = vmatpush2.xpose.msra.mxu0 0.0
    %326 = vmatprep.subr.mxu0 0.0
    %327 = vmatpush2.xpose.msra.mxu0 0.0
    %328 = vmatprep.subr.mxu0 0.0
    %329 = vmatpush2.xpose.msra.mxu0 0.0
    %330 = vmatprep.subr.mxu0 0.0
    %331 = vmatpush2.xpose.msra.mxu0 0.0
    %332 = vmatprep.subr.mxu0 0.0
    %333 = vmatpush2.xpose.msra.mxu0 0.0
    %334 = vmatprep.subr.mxu0 0.0
    %335 = vmatpush2.xpose.msra.mxu0 0.0
    %336 = vmatprep.subr.mxu0 0.0
    %337 = vmatpush2.xpose.msra.mxu0 0.0
    %338 = vmatprep.subr.mxu0 0.0
    %339 = vmatpush2.xpose.msra.mxu0 0.0
    %340 = vmatprep.subr.mxu0 0.0
    %341 = vmatpush2.xpose.msra.mxu0 0.0
    %342 = vmatprep.mubr.f32.mxu0 0.0
    %343 = vmatmul.mubr.f32.gmra.mxu0 %v270
    %v344 = vpop.f32.mrf.mxu0
    %v345 = vadd.f32 0.0, %v344
    %v346 = vpop.f32.mrf.mxu0
    %347 = vdwg.mxu0
    %v348 = vmul.f32 %v258, %v345
    %v349 = vadd.f32 %v247, %v348
    %v350 = vld [vmem:[%s2 + $0x30] sm:$0xff]
    %v351 = vld [vmem:[%s2 + $0x38] sm:$0xff]
    %v352 = vld [vmem:[%s2 + $0x40] sm:$0xff]
    %v353 = vld [vmem:[%s2 + $0x48] sm:$0xff]
    %v354 = vld [vmem:[%s3 + $0x30] sm:$0xff]
    %v355 = vld [vmem:[%s3 + $0x38] sm:$0xff]
    %v356 = vld [vmem:[%s3 + $0x40] sm:$0xff]
    %v357 = vld [vmem:[%s3 + $0x48] sm:$0xff]
    %359 = vset.pattern.permute.xlu0 0
    %360 = vperm.xlu0 %359, %v354
    %v361 = vpop.permute.xlu0 %360
    %364 = vset.pattern.permute.xlu0 0
    %365 = vperm.xlu0 %364, %v355
    %v366 = vpop.permute.xlu0 %365
    %369 = vset.pattern.permute.xlu0 0
    %370 = vperm.xlu0 %369, %v356
    %v371 = vpop.permute.xlu0 %370
    %374 = vset.pattern.permute.xlu0 0
    %375 = vperm.xlu0 %374, %v357
    %v376 = vpop.permute.xlu0 %375
    %v379 = vsel %vm268, %v350, 0
    %v382 = vsel %vm268, %v351, 0
    %v385 = vsel %vm268, %v352, 0
    %v388 = vsel %vm268, %v353, 0
    %390 = vmatprep.subr.mxu0 0.0
    %391 = vmatpush1.msra.mxu0 0.0
    %392 = vmatprep.subr.mxu0 0.0
    %393 = vmatpush1.msra.mxu0 0.0
    %394 = vmatprep.subr.mxu0 0.0
    %395 = vmatpush1.msra.mxu0 0.0
    %396 = vmatprep.subr.mxu0 0.0
    %397 = vmatpush1.msra.mxu0 0.0
    %398 = vmatprep.subr.mxu0 0.0
    %399 = vmatpush1.msra.mxu0 0.0
    %400 = vmatprep.subr.mxu0 0.0
    %401 = vmatpush1.msra.mxu0 0.0
    %402 = vmatprep.subr.mxu0 0.0
    %403 = vmatpush1.msra.mxu0 0.0
    %404 = vmatprep.subr.mxu0 0.0
    %405 = vmatpush1.msra.mxu0 0.0
    %406 = vmatprep.subr.mxu0 0.0
    %407 = vmatpush1.msra.mxu0 0.0
    %408 = vmatprep.subr.mxu0 0.0
    %409 = vmatpush1.msra.mxu0 0.0
    %410 = vmatprep.subr.mxu0 0.0
    %411 = vmatpush1.msra.mxu0 0.0
    %412 = vmatprep.subr.mxu0 0.0
    %413 = vmatpush1.msra.mxu0 0.0
    %414 = vmatprep.subr.mxu0 0.0
    %415 = vmatpush1.msra.mxu0 0.0
    %416 = vmatprep.subr.mxu0 0.0
    %417 = vmatpush1.msra.mxu0 0.0
    %418 = vmatprep.subr.mxu0 0.0
    %419 = vmatpush1.msra.mxu0 0.0
    %420 = vmatprep.subr.mxu0 0.0
    %421 = vmatpush1.msra.mxu0 %v349
    %422 = vmatprep.subr.mxu0 0.0
    %423 = vmatpush2.msra.mxu0 0.0
    %424 = vmatprep.subr.mxu0 0.0
    %425 = vmatpush2.msra.mxu0 0.0
    %426 = vmatprep.subr.mxu0 0.0
    %427 = vmatpush2.msra.mxu0 0.0
    %428 = vmatprep.subr.mxu0 0.0
    %429 = vmatpush2.msra.mxu0 0.0
    %430 = vmatprep.subr.mxu0 0.0
    %431 = vmatpush2.msra.mxu0 0.0
    %432 = vmatprep.subr.mxu0 0.0
    %433 = vmatpush2.msra.mxu0 0.0
    %434 = vmatprep.subr.mxu0 0.0
    %435 = vmatpush2.msra.mxu0 0.0
    %436 = vmatprep.subr.mxu0 0.0
    %437 = vmatpush2.msra.mxu0 0.0
    %438 = vmatprep.subr.mxu0 0.0
    %439 = vmatpush2.msra.mxu0 0.0
    %440 = vmatprep.subr.mxu0 0.0
    %441 = vmatpush2.msra.mxu0 0.0
    %442 = vmatprep.subr.mxu0 0.0
    %443 = vmatpush2.msra.mxu0 0.0
    %444 = vmatprep.subr.mxu0 0.0
    %445 = vmatpush2.msra.mxu0 0.0
    %446 = vmatprep.subr.mxu0 0.0
    %447 = vmatpush2.msra.mxu0 0.0
    %448 = vmatprep.subr.mxu0 0.0
    %449 = vmatpush2.msra.mxu0 0.0
    %450 = vmatprep.subr.mxu0 0.0
    %451 = vmatpush2.msra.mxu0 0.0
    %452 = vmatprep.subr.mxu0 0.0
    %453 = vmatpush2.msra.mxu0 0.0
    %454 = vmatprep.mubr.f32.mxu0 0.0
    %455 = vmatmul.mubr.f32.gmra.mxu0 %v379
    %v456 = vpop.f32.mrf.mxu0
    %v457 = vadd.f32 %v361, %v456
    %v458 = vpop.f32.mrf.mxu0
    %459 = vmatprep.mubr.f32.mxu0 0.0
    %460 = vmatmul.mubr.f32.gmra.mxu0 %v382
    %v461 = vpop.f32.mrf.mxu0
    %v462 = vadd.f32 %v366, %v461
    %v463 = vpop.f32.mrf.mxu0
    %464 = vmatprep.mubr.f32.mxu0 0.0
    %465 = vmatmul.mubr.f32.gmra.mxu0 %v385
    %v466 = vpop.f32.mrf.mxu0
    %v467 = vadd.f32 %v371, %v466
    %v468 = vpop.f32.mrf.mxu0
    %469 = vmatprep.mubr.f32.mxu0 0.0
    %470 = vmatmul.mubr.f32.gmra.mxu0 %v388
    %v471 = vpop.f32.mrf.mxu0
    %v472 = vadd.f32 %v376, %v471
    %v473 = vpop.f32.mrf.mxu0
    %474 = vdwg.mxu0
    %v475 = vtanh.pop %v457
    %v476 = vtanh.pop %v462
    %v477 = vtanh.pop %v467
    %v478 = vtanh.pop %v472
    %v479 = vld [vmem:[%s2 + $0x50] sm:$0xff]
    %v480 = vld [vmem:[%s2 + $0x58] sm:$0xff]
    %v481 = vld [vmem:[%s3 + $0x50] sm:$0xff]
    %v482 = vld [vmem:[%s3 + $0x58] sm:$0xff]
    %484 = vset.pattern.permute.xlu0 0
    %485 = vperm.xlu0 %484, %v481
    %v486 = vpop.permute.xlu0 %485
    %489 = vset.pattern.permute.xlu0 0
    %490 = vperm.xlu0 %489, %v482
    %v491 = vpop.permute.xlu0 %490
    %v493 = vsel %vm173, %v479, 0
    %v496 = vsel %vm173, %v480, 0
    %498 = vmatprep.subr.mxu0 0.0
    %499 = vmatpush1.msra.mxu0 0.0
    %500 = vmatprep.subr.mxu0 0.0
    %501 = vmatpush1.msra.mxu0 0.0
    %502 = vmatprep.subr.mxu0 0.0
    %503 = vmatpush1.msra.mxu0 0.0
    %504 = vmatprep.subr.mxu0 0.0
    %505 = vmatpush1.msra.mxu0 0.0
    %506 = vmatprep.subr.mxu0 0.0
    %507 = vmatpush1.msra.mxu0 0.0
    %508 = vmatprep.subr.mxu0 0.0
    %509 = vmatpush1.msra.mxu0 0.0
    %510 = vmatprep.subr.mxu0 0.0
    %511 = vmatpush1.msra.mxu0 0.0
    %512 = vmatprep.subr.mxu0 0.0
    %513 = vmatpush1.msra.mxu0 0.0
    %514 = vmatprep.subr.mxu0 0.0
    %515 = vmatpush1.msra.mxu0 0.0
    %516 = vmatprep.subr.mxu0 0.0
    %517 = vmatpush1.msra.mxu0 0.0
    %518 = vmatprep.subr.mxu0 0.0
    %519 = vmatpush1.msra.mxu0 0.0
    %520 = vmatprep.subr.mxu0 0.0
    %521 = vmatpush1.msra.mxu0 0.0
    %522 = vmatprep.subr.mxu0 0.0
    %523 = vmatpush1.msra.mxu0 %v478
    %524 = vmatprep.subr.mxu0 0.0
    %525 = vmatpush1.msra.mxu0 %v477
    %526 = vmatprep.subr.mxu0 0.0
    %527 = vmatpush1.msra.mxu0 %v476
    %528 = vmatprep.subr.mxu0 0.0
    %529 = vmatpush1.msra.mxu0 %v475
    %530 = vmatprep.subr.mxu0 0.0
    %531 = vmatpush2.msra.mxu0 0.0
    %532 = vmatprep.subr.mxu0 0.0
    %533 = vmatpush2.msra.mxu0 0.0
    %534 = vmatprep.subr.mxu0 0.0
    %535 = vmatpush2.msra.mxu0 0.0
    %536 = vmatprep.subr.mxu0 0.0
    %537 = vmatpush2.msra.mxu0 0.0
    %538 = vmatprep.subr.mxu0 0.0
    %539 = vmatpush2.msra.mxu0 0.0
    %540 = vmatprep.subr.mxu0 0.0
    %541 = vmatpush2.msra.mxu0 0.0
    %542 = vmatprep.subr.mxu0 0.0
    %543 = vmatpush2.msra.mxu0 0.0
    %544 = vmatprep.subr.mxu0 0.0
    %545 = vmatpush2.msra.mxu0 0.0
    %546 = vmatprep.subr.mxu0 0.0
    %547 = vmatpush2.msra.mxu0 0.0
    %548 = vmatprep.subr.mxu0 0.0
    %549 = vmatpush2.msra.mxu0 0.0
    %550 = vmatprep.subr.mxu0 0.0
    %551 = vmatpush2.msra.mxu0 0.0
    %552 = vmatprep.subr.mxu0 0.0
    %553 = vmatpush2.msra.mxu0 0.0
    %554 = vmatprep.subr.mxu0 0.0
    %555 = vmatpush2.msra.mxu0 0.0
    %556 = vmatprep.subr.mxu0 0.0
    %557 = vmatpush2.msra.mxu0 0.0
    %558 = vmatprep.subr.mxu0 0.0
    %559 = vmatpush2.msra.mxu0 0.0
    %560 = vmatprep.subr.mxu0 0.0
    %561 = vmatpush2.msra.mxu0 0.0
    %562 = vmatprep.mubr.f32.mxu0 0.0
    %563 = vmatmul.mubr.f32.gmra.mxu0 %v493
    %v564 = vpop.f32.mrf.mxu0
    %v565 = vadd.f32 %v486, %v564
    %v566 = vpop.f32.mrf.mxu0
    %567 = vmatprep.mubr.f32.mxu0 0.0
    %568 = vmatmul.mubr.f32.gmra.mxu0 %v496
    %v569 = vpop.f32.mrf.mxu0
    %v570 = vpop.f32.mrf.mxu0
    %571 = vdwg.mxu0
    %vm572 = vcmask 125952
    %573 = vst.msk [vmem:[#allocation2] sm:$0xf] %vm572, %v565
    %v574 = vmul.f32 %v349, %v349
    %v575 = vmul.f32 %v345, %v345
    %v576 = vsub.f32 %v574, %v575
    %v577 = vmul.f32 %v576, 0.5
    %v578 = vsub.f32 %v577, %v256
    %vm579 = vcmask 130048
    %v580 = vsel %vm579, %v578, 0.0
    %v581 = vrot.slane %v580, 4
    %v582 = vadd.f32 %v580, %v581
    %v583 = vrot.slane %v582, 2
    %v584 = vadd.f32 %v582, %v583
    %v585 = vrot.slane %v584, 1
    %v586 = vadd.f32 %v584, %v585
    %vm587 = vcmask 122880
    %588 = vst.msk [vmem:[#allocation4] sm:$0x1] %vm587, %v586
    // Predicated region
    $region18: #{tpu_custom_call.1} parent=1 // pred_check
      _
    $region19: #{tpu_custom_call.1} parent=1 // pred_check_branch
      %590 = sbr.rel (0) target = $region21
    $region20: #{tpu_custom_call.1} parent=1 // pred_region
      %s592 = ssub.s32 64, 64
      %593 = vsyncadd [#allocation3], %s592
      %s595 = sshll.u32 [#allocation2], 4
      %s596 = int_to_ptr.vmem [resolvable:$true] %s595
      %598 = dma.vmem_to_hbm [thread:$0]  %s596, 64, %s4, [#allocation3]
    $region21: #{tpu_custom_call.1} parent=1 // pred_fallthru
      _
    // Predicated region
    $region22: #{tpu_custom_call.1} parent=1 // pred_check
      _
    $region23: #{tpu_custom_call.1} parent=1 // pred_check_branch
      %600 = sbr.rel (0) target = $region25
    $region24: #{tpu_custom_call.1} parent=1 // pred_region
      %s602 = ssub.s32 16, 16
      %603 = vsyncadd [#allocation5], %s602
      %s605 = sshll.u32 [#allocation4], 4
      %s606 = int_to_ptr.vmem [resolvable:$true] %s605
      %608 = dma.vmem_to_hbm [thread:$0]  %s606, 16, %s5, [#allocation5]
    $region25: #{tpu_custom_call.1} parent=1 // pred_fallthru
      _
    // Predicated region
    $region26: #{tpu_custom_call.1} parent=1 // pred_check
      _
    $region27: #{tpu_custom_call.1} parent=1 // pred_check_branch
      %610 = sbr.rel (0) target = $region29
    $region28: #{tpu_custom_call.1} parent=1 // pred_region
      %611 = dma.done [#allocation3], 64
    $region29: #{tpu_custom_call.1} parent=1 // pred_fallthru
      _
    // Predicated region
    $region30: #{tpu_custom_call.1} parent=1 // pred_check
      _
    $region31: #{tpu_custom_call.1} parent=1 // pred_check_branch
      %613 = sbr.rel (0) target = $region33
    $region32: #{tpu_custom_call.1} parent=1 // pred_region
      %614 = dma.done [#allocation5], 16
    $region33: #{tpu_custom_call.1} parent=1 // pred_fallthru
      _
    %615 = vsyncpa [#allocation3], 1
    %616 = vsyncpa [#allocation5], 1

</llo_original>
